<compile_context>
chip_gen: v5e
topology: v5e:2x2
jax: 0.10.0
libtpu: 0.0.40
codegen_flags: <defaults>
</compile_context>

<pallas_src>
import functools

import jax
import jax.numpy as jnp
from jax.experimental import pallas as pl
from jax.experimental.pallas import tpu as pltpu

MARGIN = 10.0
EPS = 1e-9

# VMEM budgeting: conservative enough for v7x (64 MiB physical per TC) while
# still giving large, roofline-friendly tiles on v5e/v6e.
_VMEM_LIMIT_BYTES = 40 * 1024 * 1024   # scoped VMEM limit requested from Mosaic
_TILE_BUDGET_BYTES = 24 * 1024 * 1024  # budget for the double-buffered inputs
_MAX_TILE_N = 32768                    # keep step count low even for small D


def _round_up(x, m):
    return ((x + m - 1) // m) * m


def _choose_tile_n(n, d, itemsize):
    """Largest TILE_N whose double-buffered footprint fits the budget."""
    sublane = max(8, 32 // itemsize)  # f32 -> 8, bf16 -> 16 (packed sublanes)
    # 2 inputs x 2 pipeline buffers of (tile_n, d) data, plus 2 buffers of the
    # (tile_n, 1) f32 target column (lane-padded to 128 in VMEM).
    bytes_per_row = 4 * d * itemsize + 2 * 128 * 4
    tile = _TILE_BUDGET_BYTES // bytes_per_row
    tile = max(sublane, (tile // sublane) * sublane)
    tile = min(tile, _MAX_TILE_N)
    tile = min(tile, _round_up(n, sublane))   # never bigger than the (padded) batch
    return int(tile)


def _balance_loss_kernel(a_ref, b_ref, t_ref, out_ref, *, n_rows, tile_n):
    # Load tile and do all math in f32 regardless of the streamed input dtype.
    a = a_ref[...].astype(jnp.float32)                    # (tile_n, D)
    b = b_ref[...].astype(jnp.float32)
    diff = a - b                                          # VPU
    dist = jnp.sum(diff * diff, axis=1, keepdims=True)    # (tile_n, 1) row reduce (XLU)
    t = t_ref[...]                                        # (tile_n, 1) f32

    hinge = jnp.maximum(MARGIN - jnp.sqrt(dist + EPS), 0.0)   # sqrt -> EUP
    losses = 0.5 * (t * dist + (1.0 - t) * hinge * hinge)     # (tile_n, 1)

    # Mask padded rows of a ragged tail tile (static no-op when N % tile_n == 0).
    if n_rows % tile_n:
        row = (pl.program_id(0) * tile_n
               + jax.lax.broadcasted_iota(jnp.int32, (tile_n, 1), 0))
        losses = jnp.where(row < n_rows, losses, 0.0)

    partial = jnp.sum(losses)

    # Per-tile partial sum into this step's own (8, 128) output block: value at
    # [0, 0], zeros elsewhere (keeps the grid axis "parallel"-safe and the
    # output store lane-dense / unmasked).
    r = jax.lax.broadcasted_iota(jnp.int32, (8, 128), 0)
    c = jax.lax.broadcasted_iota(jnp.int32, (8, 128), 1)
    out_ref[...] = jnp.where((r == 0) & (c == 0), partial, 0.0)


def balance_loss(predsA, predsB, target, *, tile_n=None):
    """predsA, predsB: (N, D) f32/bf16; target: (N,) int/bool/float -> scalar f32."""
    N, D = predsA.shape
    assert predsB.shape == (N, D)
    itemsize = jnp.dtype(predsA.dtype).itemsize
    if tile_n is None:
        tile_n = _choose_tile_n(N, D, itemsize)
    num_tiles = pl.cdiv(N, tile_n)

    # Match PyTorch semantics: target.float() (no int truncation in the wrapper).
    t_col = target.astype(jnp.float32).reshape(N, 1)

    kernel = functools.partial(_balance_loss_kernel, n_rows=N, tile_n=tile_n)

    partials = pl.pallas_call(
        kernel,
        out_shape=jax.ShapeDtypeStruct((num_tiles * 8, 128), jnp.float32),
        grid_spec=pltpu.PrefetchScalarGridSpec(
            num_scalar_prefetch=0,
            grid=(num_tiles,),
            in_specs=[
                pl.BlockSpec((tile_n, D), lambda i: (i, 0)),
                pl.BlockSpec((tile_n, D), lambda i: (i, 0)),
                pl.BlockSpec((tile_n, 1), lambda i: (i, 0)),
            ],
            out_specs=pl.BlockSpec((8, 128), lambda i: (i, 0)),
        ),
        compiler_params=pltpu.CompilerParams(
            dimension_semantics=("parallel",),   # shards tiles across TCs on v7x
            vmem_limit_bytes=_VMEM_LIMIT_BYTES,
        ),
        cost_estimate=pl.CostEstimate(
            flops=3 * N * D + 8 * N,
            transcendentals=N,
            bytes_accessed=2 * N * D * itemsize + N * 4 + num_tiles * 8 * 128 * 4,
        ),
    )(predsA, predsB, t_col)

    # Tiny final reduction over per-tile partials (only element [0,0] of each
    # (8,128) block is nonzero).
    return jnp.sum(partials)


def _reference(predsA, predsB, target):
    distances = jnp.sum(
        (predsA.astype(jnp.float32) - predsB.astype(jnp.float32)) ** 2, axis=1)
    t = target.astype(jnp.float32)
    hinge = jnp.maximum(MARGIN - jnp.sqrt(distances + EPS), 0.0)
    losses = 0.5 * (t * distances + (1.0 - t) * hinge ** 2)
    return jnp.sum(losses)


if __name__ == "__main__":
    key = jax.random.PRNGKey(0)
    kA, kB, kT = jax.random.split(key, 3)

    # Small demo shapes: batch of 8 pairs, 32-dim embeddings.
    N, D = 8, 32
    predsA = jax.random.normal(kA, (N, D), dtype=jnp.float32)
    predsB = jax.random.normal(kB, (N, D), dtype=jnp.float32)
    target = jax.random.bernoulli(kT, 0.5, (N,)).astype(jnp.float32)

    loss = jax.block_until_ready(balance_loss(predsA, predsB, target))
    ref = _reference(predsA, predsB, target)
    assert jnp.allclose(loss, ref, rtol=1e-5, atol=1e-5), (loss, ref)

    # Multi-tile case with a ragged tail tile (exercises masking + pipelining).
    k1, k2, k3 = jax.random.split(jax.random.PRNGKey(1), 3)
    N2, D2 = 300, 32
    A2 = jax.random.normal(k1, (N2, D2), dtype=jnp.float32)
    B2 = jax.random.normal(k2, (N2, D2), dtype=jnp.float32)
    t2 = jax.random.bernoulli(k3, 0.5, (N2,)).astype(jnp.float32)
    loss2 = jax.block_until_ready(balance_loss(A2, B2, t2, tile_n=128))
    ref2 = _reference(A2, B2, t2)
    assert jnp.allclose(loss2, ref2, rtol=1e-4, atol=1e-3), (loss2, ref2)

    # bf16 inputs stream directly (no wrapper upcast); math is still f32 in-kernel.
    A3 = A2.astype(jnp.bfloat16)
    B3 = B2.astype(jnp.bfloat16)
    loss3 = jax.block_until_ready(balance_loss(A3, B3, t2, tile_n=128))
    ref3 = _reference(A3, B3, t2)
    assert jnp.allclose(loss3, ref3, rtol=2e-3, atol=1e-2), (loss3, ref3)

    print("KERNEL_OK")
</pallas_src>

<mosaic_0001>
module attributes {stable_mosaic.version = 11 : i64} {
  func.func @_balance_loss_kernel(%arg0: i32, %arg1: memref<8x32xf32, #tpu.memory_space<vmem>>, %arg2: memref<8x32xf32, #tpu.memory_space<vmem>>, %arg3: memref<8x1xf32, #tpu.memory_space<vmem>>, %arg4: memref<8x128xf32, #tpu.memory_space<vmem>>) attributes {dimension_semantics = [#tpu.dimension_semantics<parallel>], iteration_bounds = array<i64: 1>, scalar_prefetch = 0 : i64, scratch_operands = 0 : i64, tpu.core_type = #tpu.core_type<tc>, window_params = [{transform_indices = @transform_0, window_bounds = array<i64: 8, 32>}, {transform_indices = @transform_1, window_bounds = array<i64: 8, 32>}, {transform_indices = @transform_2, window_bounds = array<i64: 8, 1>}, {transform_indices = @transform_3, window_bounds = array<i64: 8, 128>}]} {
    %c0 = arith.constant 0 : index
    %c0_0 = arith.constant 0 : index
    %0 = vector.load %arg1[%c0, %c0_0] : memref<8x32xf32, #tpu.memory_space<vmem>>, vector<8x32xf32>
    %c0_1 = arith.constant 0 : index
    %c0_2 = arith.constant 0 : index
    %1 = vector.load %arg2[%c0_1, %c0_2] : memref<8x32xf32, #tpu.memory_space<vmem>>, vector<8x32xf32>
    %2 = arith.subf %0, %1 : vector<8x32xf32>
    %3 = arith.mulf %2, %2 : vector<8x32xf32>
    %cst = arith.constant dense<0.000000e+00> : vector<8xf32>
    %4 = vector.multi_reduction <add>, %3, %cst [1] : vector<8x32xf32> to vector<8xf32>
    %5 = vector.shape_cast %4 : vector<8xf32> to vector<8x1xf32>
    %c0_3 = arith.constant 0 : index
    %c0_4 = arith.constant 0 : index
    %6 = vector.load %arg3[%c0_3, %c0_4] : memref<8x1xf32, #tpu.memory_space<vmem>>, vector<8x1xf32>
    %cst_5 = arith.constant 9.99999971E-10 : f32
    %7 = vector.broadcast %cst_5 : f32 to vector<8x1xf32>
    %8 = arith.addf %5, %7 : vector<8x1xf32>
    %9 = math.sqrt %8 : vector<8x1xf32>
    %cst_6 = arith.constant 1.000000e+01 : f32
    %10 = vector.broadcast %cst_6 : f32 to vector<8x1xf32>
    %11 = arith.subf %10, %9 : vector<8x1xf32>
    %cst_7 = arith.constant 0.000000e+00 : f32
    %12 = vector.broadcast %cst_7 : f32 to vector<8x1xf32>
    %13 = arith.maximumf %11, %12 : vector<8x1xf32>
    %14 = arith.mulf %6, %5 : vector<8x1xf32>
    %cst_8 = arith.constant 1.000000e+00 : f32
    %15 = vector.broadcast %cst_8 : f32 to vector<8x1xf32>
    %16 = arith.subf %15, %6 : vector<8x1xf32>
    %17 = arith.mulf %16, %13 : vector<8x1xf32>
    %18 = arith.mulf %17, %13 : vector<8x1xf32>
    %19 = arith.addf %14, %18 : vector<8x1xf32>
    %cst_9 = arith.constant 5.000000e-01 : f32
    %20 = vector.broadcast %cst_9 : f32 to vector<8x1xf32>
    %21 = arith.mulf %20, %19 : vector<8x1xf32>
    %22 = vector.shape_cast %21 : vector<8x1xf32> to vector<1x8x1xf32>
    %cst_10 = arith.constant dense<0.000000e+00> : vector<1xf32>
    %23 = vector.multi_reduction <add>, %22, %cst_10 [1, 2] : vector<1x8x1xf32> to vector<1xf32>
    %24 = vector.shape_cast %23 : vector<1xf32> to vector<1x1x1xf32>
    %25 = vector.extract %24[0, 0, 0] : f32 from vector<1x1x1xf32>
    %26 = tpu.iota {dimensions = array<i32: 0>} : vector<8x128xi32>
    %27 = tpu.iota {dimensions = array<i32: 1>} : vector<8x128xi32>
    %c0_i32 = arith.constant 0 : i32
    %28 = vector.broadcast %c0_i32 : i32 to vector<8x128xi32>
    %29 = arith.cmpi eq, %26, %28 : vector<8x128xi32>
    %c0_i32_11 = arith.constant 0 : i32
    %30 = vector.broadcast %c0_i32_11 : i32 to vector<8x128xi32>
    %31 = arith.cmpi eq, %27, %30 : vector<8x128xi32>
    %32 = arith.andi %29, %31 : vector<8x128xi1>
    %cst_12 = arith.constant 0.000000e+00 : f32
    %33 = vector.broadcast %25 : f32 to vector<8x128xf32>
    %34 = vector.broadcast %cst_12 : f32 to vector<8x128xf32>
    %35 = arith.select %32, %33, %34 : vector<8x128xi1>, vector<8x128xf32>
    %c0_13 = arith.constant 0 : index
    %c0_14 = arith.constant 0 : index
    %36 = vector.load %arg4[%c0_13, %c0_14] : memref<8x128xf32, #tpu.memory_space<vmem>>, vector<8x128xf32>
    tpu.vector_store %arg4[%c0_13, %c0_14], %35 {strides = array<i32>} : memref<8x128xf32, #tpu.memory_space<vmem>>, vector<8x128xf32>,
    return
  }
  func.func @transform_0(%arg0: i32) -> (i32, i32) {
    %c0_i32 = arith.constant 0 : i32
    %c0_i32_0 = arith.constant 0 : i32
    return %arg0, %c0_i32 : i32, i32
  }
  func.func @transform_1(%arg0: i32) -> (i32, i32) {
    %c0_i32 = arith.constant 0 : i32
    %c0_i32_0 = arith.constant 0 : i32
    return %arg0, %c0_i32 : i32, i32
  }
  func.func @transform_2(%arg0: i32) -> (i32, i32) {
    %c0_i32 = arith.constant 0 : i32
    %c0_i32_0 = arith.constant 0 : i32
    return %arg0, %c0_i32 : i32, i32
  }
  func.func @transform_3(%arg0: i32) -> (i32, i32) {
    %c0_i32 = arith.constant 0 : i32
    %c0_i32_0 = arith.constant 0 : i32
    return %arg0, %c0_i32 : i32, i32
  }
}

</mosaic_0001>

<llo_original>
// kernel: tpu_custom_call.1
$region0: #{tpu_custom_call.1}
  #allocation0 [shape = 'u32[]', space=smem, size = 0x4, offset = 0x4, fixed_abs, tag = 'smem constant byte address 0x4 - core index']
  #allocation1 [shape = 'u32[72,128]{1,0:T(1,128)}', space=vmem, size = 0x9000, scoped, tag = 'internal scratch']
  %s0 = inlined_call_operand.vmem [shape: f32[8,32], index: 0, kind: input, shape index: {}]
  %s1 = inlined_call_operand.hbm [shape: f32[8,32], index: 1, kind: input, shape index: {}]
  %s2 = inlined_call_operand.vmem [shape: f32[8,1], index: 2, kind: input, shape index: {}]
  %s3 = inlined_call_operand.hbm [shape: f32[8,128], index: 3, kind: output, shape index: {}]
  %s4 = sld [smem:[#allocation0]]
  $region26: #{tpu_custom_call.1} parent=0
    _
  %s6 = ssub.s32 1, %s4
  %s7 = scalar_select 0, %s6, %s4
  $region1: #{tpu_custom_call.1} parent=0
    #allocation2 [shape = 'u8[4096]{0}', space=vmem, size = 0x1000, scoped, tag = 'input window, operand 1, single buffered']
    #allocation3 [shape = 's32[1]{0}', space=sflag, size = 0x4, scoped, tag = 'scoped memory for tpu_custom_call.1']
    #allocation4 [shape = 's32[1]{0}', space=sflag, size = 0x4, scoped, tag = 'scoped memory for tpu_custom_call.1']
    #allocation5 [shape = 'u8[4096]{0}', space=vmem, size = 0x1000, scoped, tag = 'output window, operand 0, single buffered']
    %8 = vsyncpa [#allocation3], 0
    %9 = vsyncpa [#allocation4], 0
    // Predicated region
    $region2: #{tpu_custom_call.1} parent=1 // pred_check
      _
    $region3: #{tpu_custom_call.1} parent=1 // pred_check_branch
      %11 = sbr.rel (0) target = $region5
    $region4: #{tpu_custom_call.1} parent=1 // pred_region
      _
    $region5: #{tpu_custom_call.1} parent=1 // pred_fallthru
      _
    // Predicated region
    $region6: #{tpu_custom_call.1} parent=1 // pred_check
      _
    $region7: #{tpu_custom_call.1} parent=1 // pred_check_branch
      %13 = sbr.rel (0) target = $region9
    $region8: #{tpu_custom_call.1} parent=1 // pred_region
      %15 = vsyncadd [#allocation3], 0
      %s17 = sshll.u32 %s1, 4
      %s18 = int_to_ptr.hbm [resolvable:$true] %s17
      %s19 = sshll.u32 [#allocation2], 4
      %s20 = int_to_ptr.vmem [resolvable:$true] %s19
      %22 = dma.hbm_to_vmem [thread:$0]  %s18, 128, %s20, [#allocation3]
    $region9: #{tpu_custom_call.1} parent=1 // pred_fallthru
      _
    // Predicated region
    $region10: #{tpu_custom_call.1} parent=1 // pred_check
      _
    $region11: #{tpu_custom_call.1} parent=1 // pred_check_branch
      %24 = sbr.rel (0) target = $region13
    $region12: #{tpu_custom_call.1} parent=1 // pred_region
      _
    $region13: #{tpu_custom_call.1} parent=1 // pred_fallthru
      _
    // Predicated region
    $region14: #{tpu_custom_call.1} parent=1 // pred_check
      _
    $region15: #{tpu_custom_call.1} parent=1 // pred_check_branch
      %26 = sbr.rel (0) target = $region17
    $region16: #{tpu_custom_call.1} parent=1 // pred_region
      %28 = dma.done [#allocation3], 128
    $region17: #{tpu_custom_call.1} parent=1 // pred_fallthru
      _
    %v29 = vld [vmem:[%s0] sm:$0xff]
    %v30 = vld [vmem:[#allocation2] sm:$0xff]
    %v31 = vsub.f32 %v29, %v30
    %v32 = vmul.f32 %v31, %v31
    %vm33 = vcmask 261120
    %v34 = vsel %vm33, %v32, 0.0
    %35 = vadd.xlane.f32.xlu0 %v34
    %v36 = vpop.xlane.xlu0 %35
    %v37 = vld [vmem:[%s2] sm:$0xff]
    %v38 = vadd.f32 %v36, 1e-09
    %v39 = vrsqrt.pop %v38
    %v40 = vmul.f32 %v39, %v38
    %v41 = vmul.f32 %v40, %v39
    %v42 = vmul.f32 0.5, %v41
    %v43 = vsub.f32 1.5, %v42
    %v44 = vmul.f32 %v39, %v43
    %v45 = vmul.f32 %v38, %v44
    %vm46 = vcmp.eq.f32.partialorder %v38, inf
    %v47 = vsel %vm46, %v38, %v45
    %vm48 = vcmp.eq.f32.partialorder %v38, 0.0
    %v49 = vand.u32 %v38, 2147483648
    %v50 = vsel %vm48, %v49, %v47
    %v51 = vsub.f32 10.0, %v50
    %v52 = vmax.f32 %v51, 0.0
    %v53 = vmul.f32 %v37, %v36
    %v54 = vsub.f32 1.0, %v37
    %v55 = vmul.f32 %v54, %v52
    %v56 = vmul.f32 %v55, %v52
    %v57 = vadd.f32 %v53, %v56
    %v58 = vmul.f32 %v57, 0.5
    %vm59 = vcmask 7168
    %v60 = vsel %vm59, %v58, 0.0
    %61 = vadd.xlane.f32.xlu0 %v60
    %v62 = vpop.xlane.xlu0 %61
    %v63 = vrot.slane %v62, 4
    %v64 = vadd.f32 %v62, %v63
    %v65 = vrot.slane %v64, 2
    %v66 = vadd.f32 %v64, %v65
    %v67 = vrot.slane %v66, 1
    %v68 = vadd.f32 %v66, %v67
    %s69 = vtos %v68
    %v70 = vlaneseq
    %v71 = vshrl.u32 %v70, 7
    %v72 = vlaneseq
    %v73 = vand.u32 %v72, 127
    %vm74 = vcmp.eq.s32.totalorder %v71, 0
    %vm75 = vcmp.eq.s32.totalorder %v73, 0
    %vm76 = vmand %vm74, %vm75
    %v77 = vstv %s69
    %v78 = vsel %vm76, %v77, 0.0
    %79 = vst [vmem:[#allocation5] sm:$0xff] %v78
    // Predicated region
    $region18: #{tpu_custom_call.1} parent=1 // pred_check
      _
    $region19: #{tpu_custom_call.1} parent=1 // pred_check_branch
      %81 = sbr.rel (0) target = $region21
    $region20: #{tpu_custom_call.1} parent=1 // pred_region
      %83 = vsyncadd [#allocation4], 0
      %s85 = sshll.u32 [#allocation5], 4
      %s86 = int_to_ptr.vmem [resolvable:$true] %s85
      %s87 = sshll.u32 %s3, 4
      %s88 = int_to_ptr.hbm [resolvable:$true] %s87
      %90 = dma.vmem_to_hbm [thread:$0]  %s86, 128, %s88, [#allocation4]
    $region21: #{tpu_custom_call.1} parent=1 // pred_fallthru
      _
    // Predicated region
    $region22: #{tpu_custom_call.1} parent=1 // pred_check
      _
    $region23: #{tpu_custom_call.1} parent=1 // pred_check_branch
      %92 = sbr.rel (0) target = $region25
    $region24: #{tpu_custom_call.1} parent=1 // pred_region
      %94 = dma.done [#allocation4], 128
    $region25: #{tpu_custom_call.1} parent=1 // pred_fallthru
      _
    %95 = vsyncpa [#allocation3], 1
    %96 = vsyncpa [#allocation4], 1

</llo_original>
